<compile_context>
chip_gen: v7x
topology: tpu7x:2x2x1
jax: 0.10.0
libtpu: 0.0.40
codegen_flags: <defaults>
</compile_context>

<pallas_src>
import jax
import jax.numpy as jnp
from jax.experimental import pallas as pl
from jax.experimental.pallas import tpu as pltpu

BN_EPS = 1e-5


# ---------------------------------------------------------------------------
# Kernel: fused 2-hidden-layer MLP (BN pre-folded) + output layer + sigmoid
# ---------------------------------------------------------------------------
def fnn_mlp_kernel(x_ref, w1_ref, b1_ref, w2_ref, b2_ref, wo_ref, bo_ref,
                   out_ref):
    # layer 1: Linear (BN folded into w1/b1) -> ReLU.  Dropout is eval-mode
    # identity.
    h = jnp.dot(x_ref[...], w1_ref[...], preferred_element_type=jnp.float32)
    h = jnp.maximum(h + b1_ref[...], 0.0)                       # f32 VPU

    # layer 2
    h = jnp.dot(h.astype(w2_ref.dtype), w2_ref[...],
                preferred_element_type=jnp.float32)
    h = jnp.maximum(h + b2_ref[...], 0.0)                       # (TB, D2) f32

    # output layer: N=1 contraction done as (1, D2) x (TB, D2)^T -> (1, TB)
    # so the stored logits are lane-dense (no (TB, 1) masked stores).
    logit = jax.lax.dot_general(
        wo_ref[...], h.astype(wo_ref.dtype),
        dimension_numbers=(((1,), (1,)), ((), ())),
        preferred_element_type=jnp.float32)                     # (1, TB)
    out_ref[...] = jax.nn.sigmoid(logit + bo_ref[...])

    # TODO(synk): training-mode Dropout (pltpu.prng_random_bits) and
    # training-mode BatchNorm statistics are not implemented (eval semantics).


# ---------------------------------------------------------------------------
# Parameter construction (PyTorch-equivalent raw params) and BN folding
# ---------------------------------------------------------------------------
def make_raw_params(key, field_dims, embed_dim, mlp_dims):
    vocab = int(sum(field_dims))
    embed_output_dim = len(field_dims) * embed_dim
    dims = [embed_output_dim] + list(mlp_dims)

    keys = iter(jax.random.split(key, 1 + 6 * len(mlp_dims) + 2))

    offs = [0]
    for d in field_dims[:-1]:
        offs.append(offs[-1] + d)

    params = {
        "embedding": 0.01 * jax.random.normal(
            next(keys), (vocab, embed_dim), jnp.float32),
        "offsets": jnp.asarray(offs, dtype=jnp.int32),
    }

    layers = []
    for li in range(len(mlp_dims)):
        d_in, d_out = dims[li], dims[li + 1]
        w = jax.random.normal(next(keys), (d_in, d_out), jnp.float32) / jnp.sqrt(d_in)
        b = 0.01 * jax.random.normal(next(keys), (1, d_out), jnp.float32)
        g = 1.0 + 0.1 * jax.random.normal(next(keys), (1, d_out), jnp.float32)
        be = 0.1 * jax.random.normal(next(keys), (1, d_out), jnp.float32)
        m = 0.1 * jax.random.normal(next(keys), (1, d_out), jnp.float32)
        v = 0.5 + jnp.abs(jax.random.normal(next(keys), (1, d_out), jnp.float32))
        layers.append((w, b, g, be, m, v))
    params["layers"] = layers

    d_last = dims[-1]
    params["w_out"] = jax.random.normal(next(keys), (d_last, 1), jnp.float32) / jnp.sqrt(d_last)
    params["b_out"] = 0.01 * jax.random.normal(next(keys), (1, 1), jnp.float32)
    return params


def prepare_kernel_params(raw, compute_dtype=jnp.bfloat16):
    """Fold eval-mode BatchNorm into the Linear layers; cast MXU operands."""
    assert len(raw["layers"]) == 2, "kernel is specialized for 2 hidden layers"
    kp = {
        "offsets": raw["offsets"],
        "embedding": raw["embedding"].astype(compute_dtype),
    }
    folded = []
    for (w, b, g, be, m, v) in raw["layers"]:
        scale = g * jax.lax.rsqrt(v + BN_EPS)                    # (1, d_out)
        w_f = (w * scale).astype(compute_dtype)                  # (d_in, d_out)
        b_f = ((b - m) * scale + be).astype(jnp.float32)         # (1, d_out)
        folded.append((w_f, b_f))
    (kp["w1"], kp["b1"]), (kp["w2"], kp["b2"]) = folded
    kp["wo"] = raw["w_out"].T.astype(compute_dtype)              # (1, d_last)
    kp["bo"] = raw["b_out"].astype(jnp.float32)                  # (1, 1)
    return kp


# ---------------------------------------------------------------------------
# Forward wrapper
# ---------------------------------------------------------------------------
def _pick_tile(batch, tile_b):
    if batch <= tile_b:
        # single tile: round batch up to a sublane multiple
        return max(8, -(-batch // 8) * 8)
    assert tile_b % 128 == 0, "multi-tile batch tile must be a multiple of 128"
    return tile_b


def fnn_forward(x_idx, kparams, tile_b=512):
    """x_idx: (B, F) int32 feature ids. Returns (B,) f32 sigmoid probabilities."""
    B, _ = x_idx.shape

    # Embedding lookup (plain JAX gather glue).
    # TODO(synk): fuse this gather into the kernel (scalar-prefetch ids +
    # manual DMA from an HBM-resident table) to avoid materializing embed_out
    # in HBM and re-reading it — ~2x HBM traffic saving at scale.
    ids = x_idx + kparams["offsets"][None, :]
    embed_out = jnp.take(kparams["embedding"], ids, axis=0).reshape(B, -1)

    TB = _pick_tile(B, tile_b)
    n_tiles = pl.cdiv(B, TB)
    B_pad = n_tiles * TB
    if B_pad != B:
        embed_out = jnp.pad(embed_out, ((0, B_pad - B), (0, 0)))

    w1, b1 = kparams["w1"], kparams["b1"]
    w2, b2 = kparams["w2"], kparams["b2"]
    wo, bo = kparams["wo"], kparams["bo"]
    D0, D1 = w1.shape
    D2 = w2.shape[1]

    out = pl.pallas_call(
        fnn_mlp_kernel,
        out_shape=jax.ShapeDtypeStruct((1, B_pad), jnp.float32),
        grid=(n_tiles,),
        in_specs=[
            # activation stream: tiled over batch, double-buffered by Pallas
            pl.BlockSpec((TB, D0), lambda i: (i, 0)),
            # weights / biases: constant blocks, stay resident in VMEM
            pl.BlockSpec((D0, D1), lambda i: (0, 0)),
            pl.BlockSpec((1, D1), lambda i: (0, 0)),
            pl.BlockSpec((D1, D2), lambda i: (0, 0)),
            pl.BlockSpec((1, D2), lambda i: (0, 0)),
            pl.BlockSpec((1, D2), lambda i: (0, 0)),
            pl.BlockSpec((1, 1), lambda i: (0, 0)),
        ],
        # lane-dense output slab: each grid step writes a (1, TB) stripe
        out_specs=pl.BlockSpec((1, TB), lambda i: (0, i)),
        compiler_params=pltpu.CompilerParams(
            dimension_semantics=("parallel",),
            vmem_limit_bytes=32 * 1024 * 1024),
    )(embed_out, w1, b1, w2, b2, wo, bo)
    return out[0, :B]


# ---------------------------------------------------------------------------
# References
# ---------------------------------------------------------------------------
def fnn_reference_matched(x_idx, kparams):
    """Same precision recipe as the kernel (bf16 operands, f32 accumulation)."""
    ids = x_idx + kparams["offsets"][None, :]
    x = jnp.take(kparams["embedding"], ids, axis=0).reshape(x_idx.shape[0], -1)
    h = jnp.dot(x, kparams["w1"], preferred_element_type=jnp.float32) + kparams["b1"]
    h = jnp.maximum(h, 0.0).astype(kparams["w2"].dtype)
    h = jnp.dot(h, kparams["w2"], preferred_element_type=jnp.float32) + kparams["b2"]
    h = jnp.maximum(h, 0.0).astype(kparams["wo"].dtype)
    logit = jax.lax.dot_general(
        kparams["wo"], h, (((1,), (1,)), ((), ())),
        preferred_element_type=jnp.float32) + kparams["bo"]
    return jax.nn.sigmoid(logit)[0]


def fnn_reference_f32(x_idx, raw):
    """Pure-f32 eval-mode reference with explicit BatchNorm (PyTorch semantics)."""
    ids = x_idx + raw["offsets"][None, :]
    h = jnp.take(raw["embedding"], ids, axis=0).reshape(x_idx.shape[0], -1)
    for (w, b, g, be, m, v) in raw["layers"]:
        h = h @ w + b
        h = (h - m) * jax.lax.rsqrt(v + BN_EPS) * g + be
        h = jnp.maximum(h, 0.0)
    logit = h @ raw["w_out"] + raw["b_out"]
    return jax.nn.sigmoid(logit)[:, 0]


# ---------------------------------------------------------------------------
if __name__ == "__main__":
    field_dims = [10, 10, 10, 10, 10, 10, 10, 10]   # 8 fields
    embed_dim = 16                                   # embed_output_dim = 128
    mlp_dims = (64, 32)

    key = jax.random.PRNGKey(0)
    k_params, k_x1, k_x2 = jax.random.split(key, 3)
    raw = make_raw_params(k_params, field_dims, embed_dim, mlp_dims)
    kp = prepare_kernel_params(raw)

    # --- small case: single tile --------------------------------------------
    B1 = 8
    x1 = jax.random.randint(k_x1, (B1, len(field_dims)), 0,
                            min(field_dims), dtype=jnp.int32)
    y1 = jax.block_until_ready(fnn_forward(x1, kp))
    y1_ref = fnn_reference_matched(x1, kp)
    assert y1.shape == (B1,)
    assert jnp.allclose(y1, y1_ref, atol=1e-4), (y1, y1_ref)
    # sanity vs. full-f32 eval-mode reference (bf16 operands -> loose tol)
    y1_f32 = fnn_reference_f32(x1, raw)
    assert jnp.allclose(y1, y1_f32, atol=3e-2), (y1, y1_f32)

    # --- multi-tile case: exercises the batch pipeline (4 grid steps) --------
    B2 = 512
    x2 = jax.random.randint(k_x2, (B2, len(field_dims)), 0,
                            min(field_dims), dtype=jnp.int32)
    y2 = jax.block_until_ready(fnn_forward(x2, kp, tile_b=128))
    y2_ref = fnn_reference_matched(x2, kp)
    assert y2.shape == (B2,)
    assert jnp.allclose(y2, y2_ref, atol=1e-4), float(jnp.max(jnp.abs(y2 - y2_ref)))

    print("KERNEL_OK")
</pallas_src>

<mosaic_0001>
module attributes {stable_mosaic.version = 11 : i64} {
  func.func @fnn_mlp_kernel(%arg0: i32, %arg1: memref<8x128xbf16, #tpu.memory_space<vmem>>, %arg2: memref<128x64xbf16, #tpu.memory_space<vmem>>, %arg3: memref<1x64xf32, #tpu.memory_space<vmem>>, %arg4: memref<64x32xbf16, #tpu.memory_space<vmem>>, %arg5: memref<1x32xf32, #tpu.memory_space<vmem>>, %arg6: memref<1x32xbf16, #tpu.memory_space<vmem>>, %arg7: memref<1x1xf32, #tpu.memory_space<vmem>>, %arg8: memref<1x8xf32, #tpu.memory_space<vmem>>) attributes {dimension_semantics = [#tpu.dimension_semantics<parallel>], iteration_bounds = array<i64: 1>, scalar_prefetch = 0 : i64, scratch_operands = 0 : i64, tpu.core_type = #tpu.core_type<tc>, window_params = [{transform_indices = @transform_0, window_bounds = array<i64: 8, 128>}, {pipeline_mode = #tpu.pipeline_mode<synchronous>, transform_indices = @transform_1, window_bounds = array<i64: 128, 64>}, {pipeline_mode = #tpu.pipeline_mode<synchronous>, transform_indices = @transform_2, window_bounds = array<i64: 1, 64>}, {pipeline_mode = #tpu.pipeline_mode<synchronous>, transform_indices = @transform_3, window_bounds = array<i64: 64, 32>}, {pipeline_mode = #tpu.pipeline_mode<synchronous>, transform_indices = @transform_4, window_bounds = array<i64: 1, 32>}, {pipeline_mode = #tpu.pipeline_mode<synchronous>, transform_indices = @transform_5, window_bounds = array<i64: 1, 32>}, {pipeline_mode = #tpu.pipeline_mode<synchronous>, transform_indices = @transform_6, window_bounds = array<i64: 1, 1>}, {transform_indices = @transform_7, window_bounds = array<i64: 1, 8>}]} {
    %c0 = arith.constant 0 : index
    %c0_0 = arith.constant 0 : index
    %0 = vector.load %arg1[%c0, %c0_0] : memref<8x128xbf16, #tpu.memory_space<vmem>>, vector<8x128xbf16>
    %c0_1 = arith.constant 0 : index
    %c0_2 = arith.constant 0 : index
    %1 = vector.load %arg2[%c0_1, %c0_2] : memref<128x64xbf16, #tpu.memory_space<vmem>>, vector<128x64xbf16>
    %cst = arith.constant dense<0.000000e+00> : vector<8x64xf32>
    %2 = tpu.matmul %0, %1, %cst {dimension_numbers = #tpu.dot_dimension_numbers<[1], [0], [0], [1], [0, 0, 1, 1], [], []>} : vector<8x128xbf16>, vector<128x64xbf16>, vector<8x64xf32> -> vector<8x64xf32>
    %c0_3 = arith.constant 0 : index
    %c0_4 = arith.constant 0 : index
    %3 = vector.load %arg3[%c0_3, %c0_4] : memref<1x64xf32, #tpu.memory_space<vmem>>, vector<1x64xf32>
    %4 = vector.broadcast %3 : vector<1x64xf32> to vector<8x64xf32>
    %5 = arith.addf %2, %4 : vector<8x64xf32>
    %cst_5 = arith.constant 0.000000e+00 : f32
    %6 = vector.broadcast %cst_5 : f32 to vector<8x64xf32>
    %7 = arith.maximumf %5, %6 : vector<8x64xf32>
    %8 = arith.truncf %7 : vector<8x64xf32> to vector<8x64xbf16>
    %c0_6 = arith.constant 0 : index
    %c0_7 = arith.constant 0 : index
    %9 = vector.load %arg4[%c0_6, %c0_7] : memref<64x32xbf16, #tpu.memory_space<vmem>>, vector<64x32xbf16>
    %cst_8 = arith.constant dense<0.000000e+00> : vector<8x32xf32>
    %10 = tpu.matmul %8, %9, %cst_8 {dimension_numbers = #tpu.dot_dimension_numbers<[1], [0], [0], [1], [0, 0, 1, 1], [], []>} : vector<8x64xbf16>, vector<64x32xbf16>, vector<8x32xf32> -> vector<8x32xf32>
    %c0_9 = arith.constant 0 : index
    %c0_10 = arith.constant 0 : index
    %11 = vector.load %arg5[%c0_9, %c0_10] : memref<1x32xf32, #tpu.memory_space<vmem>>, vector<1x32xf32>
    %12 = vector.broadcast %11 : vector<1x32xf32> to vector<8x32xf32>
    %13 = arith.addf %10, %12 : vector<8x32xf32>
    %cst_11 = arith.constant 0.000000e+00 : f32
    %14 = vector.broadcast %cst_11 : f32 to vector<8x32xf32>
    %15 = arith.maximumf %13, %14 : vector<8x32xf32>
    %c0_12 = arith.constant 0 : index
    %c0_13 = arith.constant 0 : index
    %16 = vector.load %arg6[%c0_12, %c0_13] : memref<1x32xbf16, #tpu.memory_space<vmem>>, vector<1x32xbf16>
    %17 = arith.truncf %15 : vector<8x32xf32> to vector<8x32xbf16>
    %cst_14 = arith.constant dense<0.000000e+00> : vector<1x8xf32>
    %18 = tpu.matmul %16, %17, %cst_14 {dimension_numbers = #tpu.dot_dimension_numbers<[1], [1], [0], [0], [0, 0, 1, 0], [], []>} : vector<1x32xbf16>, vector<8x32xbf16>, vector<1x8xf32> -> vector<1x8xf32>
    %c0_15 = arith.constant 0 : index
    %c0_16 = arith.constant 0 : index
    %19 = vector.load %arg7[%c0_15, %c0_16] : memref<1x1xf32, #tpu.memory_space<vmem>>, vector<1x1xf32>
    %20 = vector.broadcast %19 : vector<1x1xf32> to vector<1x8xf32>
    %21 = arith.addf %18, %20 : vector<1x8xf32>
    %22 = arith.negf %21 : vector<1x8xf32>
    %23 = math.exp %22 : vector<1x8xf32>
    %cst_17 = arith.constant 1.000000e+00 : f32
    %24 = vector.broadcast %cst_17 : f32 to vector<1x8xf32>
    %25 = arith.addf %24, %23 : vector<1x8xf32>
    %26 = arith.divf %24, %25 : vector<1x8xf32>
    %c0_18 = arith.constant 0 : index
    %c0_19 = arith.constant 0 : index
    %27 = vector.load %arg8[%c0_18, %c0_19] : memref<1x8xf32, #tpu.memory_space<vmem>>, vector<1x8xf32>
    tpu.vector_store %arg8[%c0_18, %c0_19], %26 {strides = array<i32>} : memref<1x8xf32, #tpu.memory_space<vmem>>, vector<1x8xf32>,
    return
  }
  func.func @transform_0(%arg0: i32) -> (i32, i32) {
    %c0_i32 = arith.constant 0 : i32
    %c0_i32_0 = arith.constant 0 : i32
    return %arg0, %c0_i32 : i32, i32
  }
  func.func @transform_1(%arg0: i32) -> (i32, i32) {
    %c0_i32 = arith.constant 0 : i32
    %c0_i32_0 = arith.constant 0 : i32
    %c0_i32_1 = arith.constant 0 : i32
    return %c0_i32, %c0_i32_0 : i32, i32
  }
  func.func @transform_2(%arg0: i32) -> (i32, i32) {
    %c0_i32 = arith.constant 0 : i32
    %c0_i32_0 = arith.constant 0 : i32
    %c0_i32_1 = arith.constant 0 : i32
    return %c0_i32, %c0_i32_0 : i32, i32
  }
  func.func @transform_3(%arg0: i32) -> (i32, i32) {
    %c0_i32 = arith.constant 0 : i32
    %c0_i32_0 = arith.constant 0 : i32
    %c0_i32_1 = arith.constant 0 : i32
    return %c0_i32, %c0_i32_0 : i32, i32
  }
  func.func @transform_4(%arg0: i32) -> (i32, i32) {
    %c0_i32 = arith.constant 0 : i32
    %c0_i32_0 = arith.constant 0 : i32
    %c0_i32_1 = arith.constant 0 : i32
    return %c0_i32, %c0_i32_0 : i32, i32
  }
  func.func @transform_5(%arg0: i32) -> (i32, i32) {
    %c0_i32 = arith.constant 0 : i32
    %c0_i32_0 = arith.constant 0 : i32
    %c0_i32_1 = arith.constant 0 : i32
    return %c0_i32, %c0_i32_0 : i32, i32
  }
  func.func @transform_6(%arg0: i32) -> (i32, i32) {
    %c0_i32 = arith.constant 0 : i32
    %c0_i32_0 = arith.constant 0 : i32
    %c0_i32_1 = arith.constant 0 : i32
    return %c0_i32, %c0_i32_0 : i32, i32
  }
  func.func @transform_7(%arg0: i32) -> (i32, i32) {
    %c0_i32 = arith.constant 0 : i32
    %c0_i32_0 = arith.constant 0 : i32
    return %c0_i32, %arg0 : i32, i32
  }
}

</mosaic_0001>

<llo_original>
// kernel: tpu_custom_call.1
$region0: #{tpu_custom_call.1}
  #allocation0 [shape = 'u32[]', space=smem, size = 0x4, offset = 0x4, fixed_abs, tag = 'smem constant byte address 0x4 - core index']
  #allocation1 [shape = 'u32[144,128]{1,0:T(1,128)}', space=vmem, size = 0x12000, scoped, tag = 'internal scratch']
  #allocation2 [shape = 'f32[1,1]{1,0:T(1,128)S(1)}', space=vmem, size = 0x200, scoped, tag = 'scoped memory for tpu_custom_call.1']
  %s0 = inlined_call_operand.vmem [shape: bf16[8,128], index: 0, kind: input, shape index: {}]
  %s1 = inlined_call_operand.vmem [shape: bf16[128,64], index: 1, kind: input, shape index: {}]
  %s2 = inlined_call_operand.vmem [shape: f32[1,64], index: 2, kind: input, shape index: {}]
  %s3 = inlined_call_operand.vmem [shape: bf16[64,32], index: 3, kind: input, shape index: {}]
  %s4 = inlined_call_operand.vmem [shape: f32[1,32], index: 4, kind: input, shape index: {}]
  %s5 = inlined_call_operand.vmem [shape: bf16[1,32], index: 5, kind: input, shape index: {}]
  %s6 = inlined_call_operand.<no memory space> [shape: f32[1,1], index: 6, kind: input, shape index: {}]
  %s7 = inlined_call_operand.hbm [shape: f32[1,8], index: 7, kind: output, shape index: {}]
  %s8 = sld [smem:[#allocation0]]
  $region38: #{tpu_custom_call.1} parent=0
    _
  %s10 = ssub.s32 1, %s8
  %s11 = scalar_select 0, %s10, %s8
  %v12 = vstv %s6
  %13 = vst [vmem:[#allocation2] sm:$0x1] %v12
  $region1: #{tpu_custom_call.1} parent=0
    #allocation3 [shape = 'u8[512]{0}', space=vmem, size = 0x400, scoped, tag = 'output window, operand 0, single buffered']
    #allocation4 [shape = 's32[1]{0}', space=sflag, size = 0x4, scoped, tag = 'scoped memory for tpu_custom_call.1']
    %14 = vsyncpa [#allocation4], 0
    // Predicated region
    $region2: #{tpu_custom_call.1} parent=1 // pred_check
      _
    $region3: #{tpu_custom_call.1} parent=1 // pred_check_branch
      %16 = sbr.rel (0) target = $region5
    $region4: #{tpu_custom_call.1} parent=1 // pred_region
      _
    $region5: #{tpu_custom_call.1} parent=1 // pred_fallthru
      _
    // Predicated region
    $region6: #{tpu_custom_call.1} parent=1 // pred_check
      _
    $region7: #{tpu_custom_call.1} parent=1 // pred_check_branch
      %18 = sbr.rel (0) target = $region9
    $region8: #{tpu_custom_call.1} parent=1 // pred_region
      _
    $region9: #{tpu_custom_call.1} parent=1 // pred_fallthru
      _
    // Predicated region
    $region10: #{tpu_custom_call.1} parent=1 // pred_check
      _
    $region11: #{tpu_custom_call.1} parent=1 // pred_check_branch
      %20 = sbr.rel (0) target = $region13
    $region12: #{tpu_custom_call.1} parent=1 // pred_region
      _
    $region13: #{tpu_custom_call.1} parent=1 // pred_fallthru
      _
    // Predicated region
    $region14: #{tpu_custom_call.1} parent=1 // pred_check
      _
    $region15: #{tpu_custom_call.1} parent=1 // pred_check_branch
      %22 = sbr.rel (0) target = $region17
    $region16: #{tpu_custom_call.1} parent=1 // pred_region
      _
    $region17: #{tpu_custom_call.1} parent=1 // pred_fallthru
      _
    // Predicated region
    $region18: #{tpu_custom_call.1} parent=1 // pred_check
      _
    $region19: #{tpu_custom_call.1} parent=1 // pred_check_branch
      %24 = sbr.rel (0) target = $region21
    $region20: #{tpu_custom_call.1} parent=1 // pred_region
      _
    $region21: #{tpu_custom_call.1} parent=1 // pred_fallthru
      _
    // Predicated region
    $region22: #{tpu_custom_call.1} parent=1 // pred_check
      _
    $region23: #{tpu_custom_call.1} parent=1 // pred_check_branch
      %26 = sbr.rel (0) target = $region25
    $region24: #{tpu_custom_call.1} parent=1 // pred_region
      _
    $region25: #{tpu_custom_call.1} parent=1 // pred_fallthru
      _
    // Predicated region
    $region26: #{tpu_custom_call.1} parent=1 // pred_check
      _
    $region27: #{tpu_custom_call.1} parent=1 // pred_check_branch
      %28 = sbr.rel (0) target = $region29
    $region28: #{tpu_custom_call.1} parent=1 // pred_region
      _
    $region29: #{tpu_custom_call.1} parent=1 // pred_fallthru
      _
    %v30 = vld [vmem:[%s0] sm:$0xf]
    %v31 = vld [vmem:[%s1] sm:$0xf]
    %v32 = vld [vmem:[%s1 + $0x4] sm:$0xf]
    %v33 = vld [vmem:[%s1 + $0x8] sm:$0xf]
    %v34 = vld [vmem:[%s1 + $0xc] sm:$0xf]
    %v35 = vld [vmem:[%s1 + $0x10] sm:$0xf]
    %v36 = vld [vmem:[%s1 + $0x14] sm:$0xf]
    %v37 = vld [vmem:[%s1 + $0x18] sm:$0xf]
    %v38 = vld [vmem:[%s1 + $0x1c] sm:$0xf]
    %v39 = vld [vmem:[%s1 + $0x20] sm:$0xf]
    %v40 = vld [vmem:[%s1 + $0x24] sm:$0xf]
    %v41 = vld [vmem:[%s1 + $0x28] sm:$0xf]
    %v42 = vld [vmem:[%s1 + $0x2c] sm:$0xf]
    %v43 = vld [vmem:[%s1 + $0x30] sm:$0xf]
    %v44 = vld [vmem:[%s1 + $0x34] sm:$0xf]
    %v45 = vld [vmem:[%s1 + $0x38] sm:$0xf]
    %v46 = vld [vmem:[%s1 + $0x3c] sm:$0xf]
    %v47 = vld [vmem:[%s2] sm:$0x1]
    %v49 = vlaneseq
    %v50 = vshrl.u32 %v49, 7
    %v51 = vsub.s32 0, %v50
    %v52 = vrot.slane %v47, %v51
    %v70 = vunpack.c.l.b16 %v31
    %v71 = vunpack.c.l.b16 %v32
    %v72 = vunpack.c.l.b16 %v33
    %v73 = vunpack.c.l.b16 %v34
    %v74 = vunpack.c.l.b16 %v35
    %v75 = vunpack.c.l.b16 %v36
    %v76 = vunpack.c.l.b16 %v37
    %v77 = vunpack.c.l.b16 %v38
    %v78 = vunpack.c.l.b16 %v39
    %v79 = vunpack.c.l.b16 %v40
    %v80 = vunpack.c.l.b16 %v41
    %v81 = vunpack.c.l.b16 %v42
    %v82 = vunpack.c.l.b16 %v43
    %v83 = vunpack.c.l.b16 %v44
    %v84 = vunpack.c.l.b16 %v45
    %v85 = vunpack.c.l.b16 %v46
    %v86 = vpack.c.b16 %v71, %v70
    %v87 = vpack.c.b16 %v73, %v72
    %v88 = vpack.c.b16 %v75, %v74
    %v89 = vpack.c.b16 %v77, %v76
    %v90 = vpack.c.b16 %v79, %v78
    %v91 = vpack.c.b16 %v81, %v80
    %v92 = vpack.c.b16 %v83, %v82
    %v93 = vpack.c.b16 %v85, %v84
    %102 = vmatprep.subr.bf16.mxu0 0
    %103 = vmatpush1.bf16.msra.mxu0 %v86
    %104 = vmatprep.subr.bf16.mxu0 0
    %105 = vmatpush1.bf16.msra.mxu0 %v87
    %106 = vmatprep.subr.bf16.mxu0 0
    %107 = vmatpush1.bf16.msra.mxu0 %v88
    %108 = vmatprep.subr.bf16.mxu0 0
    %109 = vmatpush1.bf16.msra.mxu0 %v89
    %110 = vmatprep.subr.bf16.mxu0 0
    %111 = vmatpush1.bf16.msra.mxu0 %v90
    %112 = vmatprep.subr.bf16.mxu0 0
    %113 = vmatpush1.bf16.msra.mxu0 %v91
    %114 = vmatprep.subr.bf16.mxu0 0
    %115 = vmatpush1.bf16.msra.mxu0 %v92
    %116 = vmatprep.subr.bf16.mxu0 0
    %117 = vmatpush1.bf16.msra.mxu0 %v93
    %118 = vmatprep.subr.bf16.mxu0 0
    %119 = vmatpush1.bf16.msra.mxu0 0
    %120 = vmatprep.subr.bf16.mxu0 0
    %121 = vmatpush1.bf16.msra.mxu0 0
    %122 = vmatprep.subr.bf16.mxu0 0
    %123 = vmatpush1.bf16.msra.mxu0 0
    %124 = vmatprep.subr.bf16.mxu0 0
    %125 = vmatpush1.bf16.msra.mxu0 0
    %126 = vmatprep.subr.bf16.mxu0 0
    %127 = vmatpush1.bf16.msra.mxu0 0
    %128 = vmatprep.subr.bf16.mxu0 0
    %129 = vmatpush1.bf16.msra.mxu0 0
    %130 = vmatprep.subr.bf16.mxu0 0
    %131 = vmatpush1.bf16.msra.mxu0 0
    %132 = vmatprep.subr.bf16.mxu0 0
    %133 = vmatpush1.bf16.msra.mxu0 0
    %134 = vmatprep.mubr.bf16.mxu0 0
    %135 = vmatmul.mubr.bf16.gmra.mrb[0].mxu0 %v30
    %v136 = vpop.f32.mrb[0].mxu0
    %v137 = vadd.f32 %v52, %v136
    %v138 = vpop.f32.mrb[0].mxu0
    %v139 = vpop.f32.mrb[0].mxu0
    %v140 = vpop.f32.mrb[0].mxu0
    %141 = vdwg.mxu0
    %v142 = vmax.f32 %v137, 0.0
    %v143 = vpack.c.bf16 %v142, %v142
    %v144 = vld [vmem:[%s3] sm:$0xf]
    %v145 = vld [vmem:[%s3 + $0x4] sm:$0xf]
    %v146 = vld [vmem:[%s3 + $0x8] sm:$0xf]
    %v147 = vld [vmem:[%s3 + $0xc] sm:$0xf]
    %v148 = vld [vmem:[%s3 + $0x10] sm:$0xf]
    %v149 = vld [vmem:[%s3 + $0x14] sm:$0xf]
    %v150 = vld [vmem:[%s3 + $0x18] sm:$0xf]
    %v151 = vld [vmem:[%s3 + $0x1c] sm:$0xf]
    %v152 = vld [vmem:[%s4] sm:$0x1]
    %v154 = vlaneseq
    %v155 = vshrl.u32 %v154, 7
    %v156 = vsub.s32 0, %v155
    %v157 = vrot.slane %v152, %v156
    %v167 = vunpack.c.l.b16 %v144
    %v168 = vunpack.c.l.b16 %v145
    %v169 = vunpack.c.l.b16 %v146
    %v170 = vunpack.c.l.b16 %v147
    %v171 = vunpack.c.l.b16 %v148
    %v172 = vunpack.c.l.b16 %v149
    %v173 = vunpack.c.l.b16 %v150
    %v174 = vunpack.c.l.b16 %v151
    %v175 = vpack.c.b16 %v168, %v167
    %v176 = vpack.c.b16 %v170, %v169
    %v177 = vpack.c.b16 %v172, %v171
    %v178 = vpack.c.b16 %v174, %v173
    %vm183 = vcmask 523264
    %v185 = vsel %vm183, %v143, 0
    %187 = vmatprep.subr.bf16.mxu0 0
    %188 = vmatpush1.bf16.msra.mxu0 %v175
    %189 = vmatprep.subr.bf16.mxu0 0
    %190 = vmatpush1.bf16.msra.mxu0 %v176
    %191 = vmatprep.subr.bf16.mxu0 0
    %192 = vmatpush1.bf16.msra.mxu0 %v177
    %193 = vmatprep.subr.bf16.mxu0 0
    %194 = vmatpush1.bf16.msra.mxu0 %v178
    %195 = vmatprep.subr.bf16.mxu0 0
    %196 = vmatpush1.bf16.msra.mxu0 0
    %197 = vmatprep.subr.bf16.mxu0 0
    %198 = vmatpush1.bf16.msra.mxu0 0
    %199 = vmatprep.subr.bf16.mxu0 0
    %200 = vmatpush1.bf16.msra.mxu0 0
    %201 = vmatprep.subr.bf16.mxu0 0
    %202 = vmatpush1.bf16.msra.mxu0 0
    %203 = vmatprep.subr.bf16.mxu0 0
    %204 = vmatpush1.bf16.msra.mxu0 0
    %205 = vmatprep.subr.bf16.mxu0 0
    %206 = vmatpush1.bf16.msra.mxu0 0
    %207 = vmatprep.subr.bf16.mxu0 0
    %208 = vmatpush1.bf16.msra.mxu0 0
    %209 = vmatprep.subr.bf16.mxu0 0
    %210 = vmatpush1.bf16.msra.mxu0 0
    %211 = vmatprep.subr.bf16.mxu0 0
    %212 = vmatpush1.bf16.msra.mxu0 0
    %213 = vmatprep.subr.bf16.mxu0 0
    %214 = vmatpush1.bf16.msra.mxu0 0
    %215 = vmatprep.subr.bf16.mxu0 0
    %216 = vmatpush1.bf16.msra.mxu0 0
    %217 = vmatprep.subr.bf16.mxu0 0
    %218 = vmatpush1.bf16.msra.mxu0 0
    %219 = vmatprep.mubr.bf16.mxu0 0
    %220 = vmatmul.mubr.bf16.gmra.mrb[0].mxu0 %v185
    %v221 = vpop.f32.mrb[0].mxu0
    %v222 = vadd.f32 %v157, %v221
    %v223 = vpop.f32.mrb[0].mxu0
    %v224 = vpop.f32.mrb[0].mxu0
    %v225 = vpop.f32.mrb[0].mxu0
    %226 = vdwg.mxu0
    %v227 = vmax.f32 %v222, 0.0
    %v228 = vld [vmem:[%s5] sm:$0x1]
    %v229 = vpack.c.bf16 %v227, %v227
    %v230 = vld [vmem:[#allocation2] sm:$0x1]
    %232 = vset.pattern.permute.xlu0 0
    %233 = vperm.xlu0 %232, %v230
    %v234 = vpop.permute.xlu0 %233
    %v236 = vlaneseq
    %v237 = vshrl.u32 %v236, 7
    %v238 = vsub.s32 0, %v237
    %v239 = vrot.slane %v234, %v238
    %vm240 = vcmask 261120
    %v242 = vsel %vm240, %v228, 0
    %v245 = vsel %vm240, %v229, 0
    %247 = vmatprep.subr.bf16.mxu0 0
    %248 = vmatpush1.bf16.xpose.msra.mxu0 %v245
    %249 = vmatprep.subr.bf16.mxu0 0
    %250 = vmatpush1.bf16.xpose.msra.mxu0 0
    %251 = vmatprep.subr.bf16.mxu0 0
    %252 = vmatpush1.bf16.xpose.msra.mxu0 0
    %253 = vmatprep.subr.bf16.mxu0 0
    %254 = vmatpush1.bf16.xpose.msra.mxu0 0
    %255 = vmatprep.subr.bf16.mxu0 0
    %256 = vmatpush1.bf16.xpose.msra.mxu0 0
    %257 = vmatprep.subr.bf16.mxu0 0
    %258 = vmatpush1.bf16.xpose.msra.mxu0 0
    %259 = vmatprep.subr.bf16.mxu0 0
    %260 = vmatpush1.bf16.xpose.msra.mxu0 0
    %261 = vmatprep.subr.bf16.mxu0 0
    %262 = vmatpush1.bf16.xpose.msra.mxu0 0
    %263 = vmatprep.subr.bf16.mxu0 0
    %264 = vmatpush1.bf16.xpose.msra.mxu0 0
    %265 = vmatprep.subr.bf16.mxu0 0
    %266 = vmatpush1.bf16.xpose.msra.mxu0 0
    %267 = vmatprep.subr.bf16.mxu0 0
    %268 = vmatpush1.bf16.xpose.msra.mxu0 0
    %269 = vmatprep.subr.bf16.mxu0 0
    %270 = vmatpush1.bf16.xpose.msra.mxu0 0
    %271 = vmatprep.subr.bf16.mxu0 0
    %272 = vmatpush1.bf16.xpose.msra.mxu0 0
    %273 = vmatprep.subr.bf16.mxu0 0
    %274 = vmatpush1.bf16.xpose.msra.mxu0 0
    %275 = vmatprep.subr.bf16.mxu0 0
    %276 = vmatpush1.bf16.xpose.msra.mxu0 0
    %277 = vmatprep.subr.bf16.mxu0 0
    %278 = vmatpush1.bf16.xpose.msra.mxu0 0
    %279 = vmatprep.mubr.bf16.mxu0 0
    %280 = vmatmul.mubr.bf16.gmra.mrb[0].mxu0 %v242
    %v281 = vpop.f32.mrb[0].mxu0
    %v282 = vadd.f32 %v239, %v281
    %v283 = vpop.f32.mrb[0].mxu0
    %v284 = vpop.f32.mrb[0].mxu0
    %v285 = vpop.f32.mrb[0].mxu0
    %286 = vdwg.mxu0
    %v287 = vxor.u32 %v282, 2147483648
    %v288 = vmul.f32 %v287, 1.442695
    %v289 = vpow.pop %v288
    %v290 = vadd.f32 %v289, 1.0
    %v291 = vrcp.pop %v290
    %v292 = vmul.f32 1.0, %v291
    %vm293 = vcmask 57344
    %294 = vst.msk [vmem:[#allocation3] sm:$0x1] %vm293, %v292
    // Predicated region
    $region30: #{tpu_custom_call.1} parent=1 // pred_check
      _
    $region31: #{tpu_custom_call.1} parent=1 // pred_check_branch
      %296 = sbr.rel (0) target = $region33
    $region32: #{tpu_custom_call.1} parent=1 // pred_region
      %s298 = ssub.s32 16, 16
      %299 = vsyncadd [#allocation4], %s298
      %s301 = sshll.u32 [#allocation3], 4
      %s302 = int_to_ptr.vmem [resolvable:$true] %s301
      %304 = dma.vmem_to_hbm [thread:$0]  %s302, 16, %s7, [#allocation4]
    $region33: #{tpu_custom_call.1} parent=1 // pred_fallthru
      _
    // Predicated region
    $region34: #{tpu_custom_call.1} parent=1 // pred_check
      _
    $region35: #{tpu_custom_call.1} parent=1 // pred_check_branch
      %306 = sbr.rel (0) target = $region37
    $region36: #{tpu_custom_call.1} parent=1 // pred_region
      %307 = dma.done [#allocation4], 16
    $region37: #{tpu_custom_call.1} parent=1 // pred_fallthru
      _
    %308 = vsyncpa [#allocation4], 1

</llo_original>
